<compile_context>
chip_gen: v5e
topology: v5e:2x2
jax: 0.10.0
libtpu: 0.0.40
codegen_flags: <defaults>
</compile_context>

<pallas_src>
import jax
import jax.numpy as jnp
from jax.experimental import pallas as pl
from jax.experimental.pallas import tpu as pltpu

# ----------------------------- problem sizes --------------------------------
N_NODES  = 32     # graph nodes per sample
IN_CH    = 16     # in_channels
HIDDEN   = 128    # hidden_channels (module default; keeps lane blocks aligned)
N_CLS    = 8      # num_classes
N_BRANCH = 5      # conv_id + conv1..conv4
N_EDGES  = 64     # random edges per graph (synthetic)
N_GRAPHS = 8      # graphs batched per pallas_call (grid axis)


# ------------------------------ Pallas kernel --------------------------------
def mimognn2_kernel(x_ref, a_ref, wcat_ref, bcat_ref, lw_ref, lb_ref, o_ref):
    """One grid step = one graph.  Per-graph refs (batch dim squeezed):

    x_ref    : (N, F)       bf16  node features
    a_ref    : (K*N, N)     bf16  [A_hat_0; ...; A_hat_4] sublane-stacked
    wcat_ref : (F, K*H)     bf16  [W_0 | ... | W_4]           (VMEM-resident)
    bcat_ref : (1, K*H)     f32   [b_0 | ... | b_4]           (VMEM-resident)
    lw_ref   : (H, C)       bf16  final linear weight         (VMEM-resident)
    lb_ref   : (1, C)       f32   final linear bias           (VMEM-resident)
    o_ref    : (N, C)       f32   log-softmax output
    """
    # 1) fused feature transform for all 5 branches: X @ [W_0|...|W_4]
    #    bf16 x bf16 on the MXU, f32 accumulation.
    xw = jnp.dot(x_ref[...], wcat_ref[...],
                 preferred_element_type=jnp.float32)            # (N, K*H) f32
    xw_b = xw.astype(jnp.bfloat16)   # feed branch matmuls on the bf16 MXU path

    # 2) per-branch propagate + bias + ReLU + accumulate (no block-diag,
    #    no (N, K*H) intermediate).  Slices are 8-sublane / 128-lane aligned.
    acc = jnp.zeros((N_NODES, HIDDEN), jnp.float32)
    for k in range(N_BRANCH):
        a_k = a_ref[pl.ds(k * N_NODES, N_NODES), :]             # (N, N) bf16
        h_k = jnp.dot(a_k, xw_b[:, k * HIDDEN:(k + 1) * HIDDEN],
                      preferred_element_type=jnp.float32)       # (N, H) f32
        b_k = bcat_ref[:, k * HIDDEN:(k + 1) * HIDDEN]          # (1, H) f32
        acc = acc + jnp.maximum(h_k + b_k, 0.0)                 # ReLU inside branch
    # Module's second ReLU on the sum is a no-op (sum of ReLUs >= 0) -> omitted.
    # Dropout is identity in eval mode -> omitted.

    # 3) classifier + log_softmax(dim=1); softmax math stays f32.
    logits = jnp.dot(acc.astype(jnp.bfloat16), lw_ref[...],
                     preferred_element_type=jnp.float32) + lb_ref[...]   # (N, C)
    m = jnp.max(logits, axis=-1, keepdims=True)
    s = logits - m
    o_ref[...] = s - jnp.log(jnp.sum(jnp.exp(s), axis=-1, keepdims=True))


def mimognn2_pallas(x_b, a_b, wcat_b, b_cat, lw_b, lb):
    """Batched forward over G graphs.  x_b: (G,N,F) bf16, a_b: (G,K*N,N) bf16."""
    G = x_b.shape[0]
    KN = N_BRANCH * N_NODES
    KH = N_BRANCH * HIDDEN
    return pl.pallas_call(
        mimognn2_kernel,
        out_shape=jax.ShapeDtypeStruct((G, N_NODES, N_CLS), jnp.float32),
        grid=(G,),
        in_specs=[
            # per-graph blocks (batch dim squeezed via None)
            pl.BlockSpec((None, N_NODES, IN_CH), lambda g: (g, 0, 0)),
            pl.BlockSpec((None, KN, N_NODES),    lambda g: (g, 0, 0)),
            # shared weights: same block every step -> stay VMEM-resident
            pl.BlockSpec((IN_CH, KH),  lambda g: (0, 0)),
            pl.BlockSpec((1, KH),      lambda g: (0, 0)),
            pl.BlockSpec((HIDDEN, N_CLS), lambda g: (0, 0)),
            pl.BlockSpec((1, N_CLS),   lambda g: (0, 0)),
        ],
        out_specs=pl.BlockSpec((None, N_NODES, N_CLS), lambda g: (g, 0, 0)),
        compiler_params=pltpu.CompilerParams(
            dimension_semantics=("parallel",)),   # v7x: shard graphs over 2 TCs
    )(x_b, a_b, wcat_b, b_cat, lw_b, lb)
    # TODO(synk): for very large G, pack 16 graphs per grid step so the output
    # block is lane-dense (N, 16*C=128) and avoids masked partial-tile stores.


# --------------------------- plain-JAX glue / setup ---------------------------
def gcn_norm_dense(edge_index, num_nodes):
    """Dense A_hat = D^{-1/2}(A + I)D^{-1/2}, matching PyG GCNConv defaults
    (unweighted edges, self-loops added, symmetric normalization).
    A_hat[dst, src] = deg^{-1/2}[src] * deg^{-1/2}[dst]."""
    src, dst = edge_index[0], edge_index[1]
    loop = jnp.arange(num_nodes, dtype=src.dtype)
    src = jnp.concatenate([src, loop])
    dst = jnp.concatenate([dst, loop])
    w = jnp.ones(src.shape, jnp.float32)

    deg = jnp.zeros((num_nodes,), jnp.float32).at[dst].add(w)
    dinv = jnp.where(deg > 0, 1.0 / jnp.sqrt(deg), 0.0)
    norm = dinv[src] * w * dinv[dst]

    a = jnp.zeros((num_nodes, num_nodes), jnp.float32).at[dst, src].add(norm)
    return a


def reference_module_f32(x, a_list, wg, bg, lw, lb):
    """Pure-f32 jnp reference of MIMOGNN2.forward (eval mode)."""
    acc = jnp.zeros((N_NODES, HIDDEN), jnp.float32)
    for k in range(N_BRANCH):
        h = a_list[k] @ (x @ wg[k]) + bg[k][None, :]
        acc = acc + jnp.maximum(h, 0.0)           # ReLU inside OneLayerGCN
    acc = jnp.maximum(acc, 0.0)                   # module's second ReLU
    logits = acc @ lw + lb
    return jax.nn.log_softmax(logits, axis=1)


def reference_kernel_precision(x_b, a_stack_b, wcat_b, b_cat, lw_b, lb):
    """Same math as the kernel with its bf16-operand / f32-accumulate choices
    mirrored exactly (bf16 products are exact in f32, so this is tight)."""
    f32 = jnp.float32
    xw = jnp.dot(x_b.astype(f32), wcat_b.astype(f32))
    xw_q = xw.astype(jnp.bfloat16).astype(f32)
    acc = jnp.zeros((N_NODES, HIDDEN), f32)
    for k in range(N_BRANCH):
        a_k = a_stack_b[k * N_NODES:(k + 1) * N_NODES].astype(f32)
        h = a_k @ xw_q[:, k * HIDDEN:(k + 1) * HIDDEN] \
            + b_cat[:, k * HIDDEN:(k + 1) * HIDDEN]
        acc = acc + jnp.maximum(h, 0.0)
    logits = acc.astype(jnp.bfloat16).astype(f32) @ lw_b.astype(f32) + lb
    return jax.nn.log_softmax(logits, axis=1)


if __name__ == "__main__":
    key = jax.random.PRNGKey(0)
    k_feat, k_edges, k_w, k_b, k_lw, k_lb = jax.random.split(key, 6)

    # shared module parameters (deterministic synthetic)
    wg = 0.1 * jax.random.normal(k_w, (N_BRANCH, IN_CH, HIDDEN), jnp.float32)
    bg = 0.05 * jax.random.normal(k_b, (N_BRANCH, HIDDEN), jnp.float32)
    lw = 0.1 * jax.random.normal(k_lw, (HIDDEN, N_CLS), jnp.float32)
    lb = 0.05 * jax.random.normal(k_lb, (1, N_CLS), jnp.float32)

    # static weight layout prep (wrapper-side plumbing, free)
    w_cat = jnp.concatenate([wg[k] for k in range(N_BRANCH)], axis=1)   # (F, K*H)
    b_cat = bg.reshape(1, N_BRANCH * HIDDEN)                            # (1, K*H)

    # per-graph features + adjacency stacks
    loop = jnp.arange(N_NODES, dtype=jnp.int32)
    feat_keys = jax.random.split(k_feat, N_GRAPHS)
    edge_keys = jax.random.split(k_edges, N_GRAPHS * (N_BRANCH - 1) * 2)

    xs, a_stacks, a_lists = [], [], []
    ei = 0
    for g in range(N_GRAPHS):
        xs.append(jax.random.normal(feat_keys[g], (N_NODES, IN_CH), jnp.float32))
        # branch 0 = conv_id on the identity (self-loop) graph; 1..4 random graphs
        edge_indices = [jnp.stack([loop, loop])]
        for _ in range(N_BRANCH - 1):
            src = jax.random.randint(edge_keys[ei], (N_EDGES,), 0, N_NODES, jnp.int32); ei += 1
            dst = jax.random.randint(edge_keys[ei], (N_EDGES,), 0, N_NODES, jnp.int32); ei += 1
            edge_indices.append(jnp.stack([src, dst]))
        a_list = [gcn_norm_dense(e, N_NODES) for e in edge_indices]
        a_lists.append(a_list)
        a_stacks.append(jnp.concatenate(a_list, axis=0))        # (K*N, N)
    x_all = jnp.stack(xs)                                       # (G, N, F) f32
    a_all = jnp.stack(a_stacks)                                 # (G, K*N, N) f32

    # bf16 matmul operands (f32 accumulation inside the kernel)
    x_b = x_all.astype(jnp.bfloat16)
    a_b = a_all.astype(jnp.bfloat16)
    wcat_b = w_cat.astype(jnp.bfloat16)
    lw_b = lw.astype(jnp.bfloat16)

    out = mimognn2_pallas(x_b, a_b, wcat_b, b_cat, lw_b, lb)
    out = jax.block_until_ready(out)
    assert out.shape == (N_GRAPHS, N_NODES, N_CLS)

    for g in range(N_GRAPHS):
        # tight structural check vs a reference with identical operand precision
        ref_tight = reference_kernel_precision(x_b[g], a_b[g], wcat_b, b_cat, lw_b, lb)
        assert jnp.allclose(out[g], ref_tight, atol=1e-3, rtol=1e-3), \
            f"graph {g}: mismatch vs precision-matched reference"
        # loose sanity check vs the full-f32 module reference (bf16 quant noise)
        ref_f32 = reference_module_f32(x_all[g], a_lists[g], wg, bg, lw, lb)
        assert jnp.allclose(out[g], ref_f32, atol=5e-2, rtol=5e-2), \
            f"graph {g}: mismatch vs f32 module reference"

    print("KERNEL_OK")
</pallas_src>

<mosaic_0001>
module attributes {stable_mosaic.version = 11 : i64} {
  func.func @mimognn2_kernel(%arg0: i32, %arg1: memref<1x32x16xbf16, #tpu.memory_space<vmem>>, %arg2: memref<1x160x32xbf16, #tpu.memory_space<vmem>>, %arg3: memref<16x640xbf16, #tpu.memory_space<vmem>>, %arg4: memref<1x640xf32, #tpu.memory_space<vmem>>, %arg5: memref<128x8xbf16, #tpu.memory_space<vmem>>, %arg6: memref<1x8xf32, #tpu.memory_space<vmem>>, %arg7: memref<1x32x8xf32, #tpu.memory_space<vmem>>) attributes {dimension_semantics = [#tpu.dimension_semantics<parallel>], iteration_bounds = array<i64: 8>, scalar_prefetch = 0 : i64, scratch_operands = 0 : i64, tpu.core_type = #tpu.core_type<tc>, window_params = [{transform_indices = @transform_0, window_bounds = array<i64: 1, 32, 16>}, {transform_indices = @transform_1, window_bounds = array<i64: 1, 160, 32>}, {pipeline_mode = #tpu.pipeline_mode<synchronous>, transform_indices = @transform_2, window_bounds = array<i64: 16, 640>}, {pipeline_mode = #tpu.pipeline_mode<synchronous>, transform_indices = @transform_3, window_bounds = array<i64: 1, 640>}, {pipeline_mode = #tpu.pipeline_mode<synchronous>, transform_indices = @transform_4, window_bounds = array<i64: 128, 8>}, {pipeline_mode = #tpu.pipeline_mode<synchronous>, transform_indices = @transform_5, window_bounds = array<i64: 1, 8>}, {transform_indices = @transform_6, window_bounds = array<i64: 1, 32, 8>}]} {
    %c0 = arith.constant 0 : index
    %c0_0 = arith.constant 0 : index
    %c0_1 = arith.constant 0 : index
    %0 = vector.load %arg1[%c0, %c0_0, %c0_1] : memref<1x32x16xbf16, #tpu.memory_space<vmem>>, vector<1x32x16xbf16>
    %1 = vector.shape_cast %0 : vector<1x32x16xbf16> to vector<32x16xbf16>
    %c0_2 = arith.constant 0 : index
    %c0_3 = arith.constant 0 : index
    %2 = vector.load %arg3[%c0_2, %c0_3] : memref<16x640xbf16, #tpu.memory_space<vmem>>, vector<16x640xbf16>
    %cst = arith.constant dense<0.000000e+00> : vector<32x640xf32>
    %3 = tpu.matmul %1, %2, %cst {dimension_numbers = #tpu.dot_dimension_numbers<[1], [0], [0], [1], [0, 0, 1, 1], [], []>} : vector<32x16xbf16>, vector<16x640xbf16>, vector<32x640xf32> -> vector<32x640xf32>
    %4 = arith.truncf %3 : vector<32x640xf32> to vector<32x640xbf16>
    %cst_4 = arith.constant 0.000000e+00 : f32
    %5 = vector.broadcast %cst_4 : f32 to vector<32x128xf32>
    %c0_5 = arith.constant 0 : index
    %c0_6 = arith.constant 0 : index
    %c0_7 = arith.constant 0 : index
    %6 = vector.load %arg2[%c0_5, %c0_6, %c0_7] : memref<1x160x32xbf16, #tpu.memory_space<vmem>>, vector<1x32x32xbf16>
    %7 = vector.shape_cast %6 : vector<1x32x32xbf16> to vector<32x32xbf16>
    %8 = vector.extract_strided_slice %4 {offsets = [0, 0], sizes = [32, 128], strides = [1, 1]} : vector<32x640xbf16> to vector<32x128xbf16>
    %cst_8 = arith.constant dense<0.000000e+00> : vector<32x128xf32>
    %9 = tpu.matmul %7, %8, %cst_8 {dimension_numbers = #tpu.dot_dimension_numbers<[1], [0], [0], [1], [0, 0, 1, 1], [], []>} : vector<32x32xbf16>, vector<32x128xbf16>, vector<32x128xf32> -> vector<32x128xf32>
    %c0_9 = arith.constant 0 : index
    %c0_10 = arith.constant 0 : index
    %10 = vector.load %arg4[%c0_9, %c0_10] : memref<1x640xf32, #tpu.memory_space<vmem>>, vector<1x128xf32>
    %11 = vector.broadcast %10 : vector<1x128xf32> to vector<32x128xf32>
    %12 = arith.addf %9, %11 : vector<32x128xf32>
    %cst_11 = arith.constant 0.000000e+00 : f32
    %13 = vector.broadcast %cst_11 : f32 to vector<32x128xf32>
    %14 = arith.maximumf %12, %13 : vector<32x128xf32>
    %15 = arith.addf %5, %14 : vector<32x128xf32>
    %c0_12 = arith.constant 0 : index
    %c32 = arith.constant 32 : index
    %c0_13 = arith.constant 0 : index
    %16 = vector.load %arg2[%c0_12, %c32, %c0_13] : memref<1x160x32xbf16, #tpu.memory_space<vmem>>, vector<1x32x32xbf16>
    %17 = vector.shape_cast %16 : vector<1x32x32xbf16> to vector<32x32xbf16>
    %18 = vector.extract_strided_slice %4 {offsets = [0, 128], sizes = [32, 128], strides = [1, 1]} : vector<32x640xbf16> to vector<32x128xbf16>
    %cst_14 = arith.constant dense<0.000000e+00> : vector<32x128xf32>
    %19 = tpu.matmul %17, %18, %cst_14 {dimension_numbers = #tpu.dot_dimension_numbers<[1], [0], [0], [1], [0, 0, 1, 1], [], []>} : vector<32x32xbf16>, vector<32x128xbf16>, vector<32x128xf32> -> vector<32x128xf32>
    %c0_15 = arith.constant 0 : index
    %c128 = arith.constant 128 : index
    %20 = vector.load %arg4[%c0_15, %c128] : memref<1x640xf32, #tpu.memory_space<vmem>>, vector<1x128xf32>
    %21 = vector.broadcast %20 : vector<1x128xf32> to vector<32x128xf32>
    %22 = arith.addf %19, %21 : vector<32x128xf32>
    %cst_16 = arith.constant 0.000000e+00 : f32
    %23 = vector.broadcast %cst_16 : f32 to vector<32x128xf32>
    %24 = arith.maximumf %22, %23 : vector<32x128xf32>
    %25 = arith.addf %15, %24 : vector<32x128xf32>
    %c0_17 = arith.constant 0 : index
    %c64 = arith.constant 64 : index
    %c0_18 = arith.constant 0 : index
    %26 = vector.load %arg2[%c0_17, %c64, %c0_18] : memref<1x160x32xbf16, #tpu.memory_space<vmem>>, vector<1x32x32xbf16>
    %27 = vector.shape_cast %26 : vector<1x32x32xbf16> to vector<32x32xbf16>
    %28 = vector.extract_strided_slice %4 {offsets = [0, 256], sizes = [32, 128], strides = [1, 1]} : vector<32x640xbf16> to vector<32x128xbf16>
    %cst_19 = arith.constant dense<0.000000e+00> : vector<32x128xf32>
    %29 = tpu.matmul %27, %28, %cst_19 {dimension_numbers = #tpu.dot_dimension_numbers<[1], [0], [0], [1], [0, 0, 1, 1], [], []>} : vector<32x32xbf16>, vector<32x128xbf16>, vector<32x128xf32> -> vector<32x128xf32>
    %c0_20 = arith.constant 0 : index
    %c256 = arith.constant 256 : index
    %30 = vector.load %arg4[%c0_20, %c256] : memref<1x640xf32, #tpu.memory_space<vmem>>, vector<1x128xf32>
    %31 = vector.broadcast %30 : vector<1x128xf32> to vector<32x128xf32>
    %32 = arith.addf %29, %31 : vector<32x128xf32>
    %cst_21 = arith.constant 0.000000e+00 : f32
    %33 = vector.broadcast %cst_21 : f32 to vector<32x128xf32>
    %34 = arith.maximumf %32, %33 : vector<32x128xf32>
    %35 = arith.addf %25, %34 : vector<32x128xf32>
    %c0_22 = arith.constant 0 : index
    %c96 = arith.constant 96 : index
    %c0_23 = arith.constant 0 : index
    %36 = vector.load %arg2[%c0_22, %c96, %c0_23] : memref<1x160x32xbf16, #tpu.memory_space<vmem>>, vector<1x32x32xbf16>
    %37 = vector.shape_cast %36 : vector<1x32x32xbf16> to vector<32x32xbf16>
    %38 = vector.extract_strided_slice %4 {offsets = [0, 384], sizes = [32, 128], strides = [1, 1]} : vector<32x640xbf16> to vector<32x128xbf16>
    %cst_24 = arith.constant dense<0.000000e+00> : vector<32x128xf32>
    %39 = tpu.matmul %37, %38, %cst_24 {dimension_numbers = #tpu.dot_dimension_numbers<[1], [0], [0], [1], [0, 0, 1, 1], [], []>} : vector<32x32xbf16>, vector<32x128xbf16>, vector<32x128xf32> -> vector<32x128xf32>
    %c0_25 = arith.constant 0 : index
    %c384 = arith.constant 384 : index
    %40 = vector.load %arg4[%c0_25, %c384] : memref<1x640xf32, #tpu.memory_space<vmem>>, vector<1x128xf32>
    %41 = vector.broadcast %40 : vector<1x128xf32> to vector<32x128xf32>
    %42 = arith.addf %39, %41 : vector<32x128xf32>
    %cst_26 = arith.constant 0.000000e+00 : f32
    %43 = vector.broadcast %cst_26 : f32 to vector<32x128xf32>
    %44 = arith.maximumf %42, %43 : vector<32x128xf32>
    %45 = arith.addf %35, %44 : vector<32x128xf32>
    %c0_27 = arith.constant 0 : index
    %c128_28 = arith.constant 128 : index
    %c0_29 = arith.constant 0 : index
    %46 = vector.load %arg2[%c0_27, %c128_28, %c0_29] : memref<1x160x32xbf16, #tpu.memory_space<vmem>>, vector<1x32x32xbf16>
    %47 = vector.shape_cast %46 : vector<1x32x32xbf16> to vector<32x32xbf16>
    %48 = vector.extract_strided_slice %4 {offsets = [0, 512], sizes = [32, 128], strides = [1, 1]} : vector<32x640xbf16> to vector<32x128xbf16>
    %cst_30 = arith.constant dense<0.000000e+00> : vector<32x128xf32>
    %49 = tpu.matmul %47, %48, %cst_30 {dimension_numbers = #tpu.dot_dimension_numbers<[1], [0], [0], [1], [0, 0, 1, 1], [], []>} : vector<32x32xbf16>, vector<32x128xbf16>, vector<32x128xf32> -> vector<32x128xf32>
    %c0_31 = arith.constant 0 : index
    %c512 = arith.constant 512 : index
    %50 = vector.load %arg4[%c0_31, %c512] : memref<1x640xf32, #tpu.memory_space<vmem>>, vector<1x128xf32>
    %51 = vector.broadcast %50 : vector<1x128xf32> to vector<32x128xf32>
    %52 = arith.addf %49, %51 : vector<32x128xf32>
    %cst_32 = arith.constant 0.000000e+00 : f32
    %53 = vector.broadcast %cst_32 : f32 to vector<32x128xf32>
    %54 = arith.maximumf %52, %53 : vector<32x128xf32>
    %55 = arith.addf %45, %54 : vector<32x128xf32>
    %56 = arith.truncf %55 : vector<32x128xf32> to vector<32x128xbf16>
    %c0_33 = arith.constant 0 : index
    %c0_34 = arith.constant 0 : index
    %57 = vector.load %arg5[%c0_33, %c0_34] : memref<128x8xbf16, #tpu.memory_space<vmem>>, vector<128x8xbf16>
    %cst_35 = arith.constant dense<0.000000e+00> : vector<32x8xf32>
    %58 = tpu.matmul %56, %57, %cst_35 {dimension_numbers = #tpu.dot_dimension_numbers<[1], [0], [0], [1], [0, 0, 1, 1], [], []>} : vector<32x128xbf16>, vector<128x8xbf16>, vector<32x8xf32> -> vector<32x8xf32>
    %c0_36 = arith.constant 0 : index
    %c0_37 = arith.constant 0 : index
    %59 = vector.load %arg6[%c0_36, %c0_37] : memref<1x8xf32, #tpu.memory_space<vmem>>, vector<1x8xf32>
    %60 = vector.broadcast %59 : vector<1x8xf32> to vector<32x8xf32>
    %61 = arith.addf %58, %60 : vector<32x8xf32>
    %cst_38 = arith.constant dense<0xFF800000> : vector<32xf32>
    %62 = vector.multi_reduction <maximumf>, %61, %cst_38 [1] : vector<32x8xf32> to vector<32xf32>
    %63 = vector.shape_cast %62 : vector<32xf32> to vector<32x1xf32>
    %64 = vector.broadcast %63 : vector<32x1xf32> to vector<32x8xf32>
    %65 = arith.subf %61, %64 : vector<32x8xf32>
    %66 = math.exp %65 : vector<32x8xf32>
    %cst_39 = arith.constant dense<0.000000e+00> : vector<32xf32>
    %67 = vector.multi_reduction <add>, %66, %cst_39 [1] : vector<32x8xf32> to vector<32xf32>
    %68 = vector.shape_cast %67 : vector<32xf32> to vector<32x1xf32>
    %69 = math.log %68 : vector<32x1xf32>
    %70 = vector.broadcast %69 : vector<32x1xf32> to vector<32x8xf32>
    %71 = arith.subf %65, %70 : vector<32x8xf32>
    %c0_40 = arith.constant 0 : index
    %c0_41 = arith.constant 0 : index
    %c0_42 = arith.constant 0 : index
    %72 = vector.load %arg7[%c0_40, %c0_41, %c0_42] : memref<1x32x8xf32, #tpu.memory_space<vmem>>, vector<1x32x8xf32>
    %73 = vector.shape_cast %72 : vector<1x32x8xf32> to vector<32x8xf32>
    %74 = vector.shape_cast %71 : vector<32x8xf32> to vector<1x32x8xf32>
    tpu.vector_store %arg7[%c0_40, %c0_41, %c0_42], %74 {strides = array<i32>} : memref<1x32x8xf32, #tpu.memory_space<vmem>>, vector<1x32x8xf32>,
    return
  }
  func.func @transform_0(%arg0: i32) -> (i32, i32, i32) {
    %c0_i32 = arith.constant 0 : i32
    %c0_i32_0 = arith.constant 0 : i32
    %c0_i32_1 = arith.constant 0 : i32
    return %arg0, %c0_i32, %c0_i32_0 : i32, i32, i32
  }
  func.func @transform_1(%arg0: i32) -> (i32, i32, i32) {
    %c0_i32 = arith.constant 0 : i32
    %c0_i32_0 = arith.constant 0 : i32
    %c0_i32_1 = arith.constant 0 : i32
    return %arg0, %c0_i32, %c0_i32_0 : i32, i32, i32
  }
  func.func @transform_2(%arg0: i32) -> (i32, i32) {
    %c0_i32 = arith.constant 0 : i32
    %c0_i32_0 = arith.constant 0 : i32
    %c0_i32_1 = arith.constant 0 : i32
    return %c0_i32, %c0_i32_0 : i32, i32
  }
  func.func @transform_3(%arg0: i32) -> (i32, i32) {
    %c0_i32 = arith.constant 0 : i32
    %c0_i32_0 = arith.constant 0 : i32
    %c0_i32_1 = arith.constant 0 : i32
    return %c0_i32, %c0_i32_0 : i32, i32
  }
  func.func @transform_4(%arg0: i32) -> (i32, i32) {
    %c0_i32 = arith.constant 0 : i32
    %c0_i32_0 = arith.constant 0 : i32
    %c0_i32_1 = arith.constant 0 : i32
    return %c0_i32, %c0_i32_0 : i32, i32
  }
  func.func @transform_5(%arg0: i32) -> (i32, i32) {
    %c0_i32 = arith.constant 0 : i32
    %c0_i32_0 = arith.constant 0 : i32
    %c0_i32_1 = arith.constant 0 : i32
    return %c0_i32, %c0_i32_0 : i32, i32
  }
  func.func @transform_6(%arg0: i32) -> (i32, i32, i32) {
    %c0_i32 = arith.constant 0 : i32
    %c0_i32_0 = arith.constant 0 : i32
    %c0_i32_1 = arith.constant 0 : i32
    return %arg0, %c0_i32, %c0_i32_0 : i32, i32, i32
  }
}

</mosaic_0001>

<llo_original>
// kernel: tpu_custom_call.1
$region0: #{tpu_custom_call.1}
  #allocation0 [shape = 'u32[]', space=smem, size = 0x4, offset = 0x4, fixed_abs, tag = 'smem constant byte address 0x4 - core index']
  #allocation1 [shape = 'u32[72,128]{1,0:T(1,128)}', space=vmem, size = 0x9000, scoped, tag = 'internal scratch']
  %s0 = inlined_call_operand.vmem [shape: bf16[8,32,16], index: 0, kind: input, shape index: {}]
  %s1 = inlined_call_operand.vmem [shape: bf16[8,160,32], index: 1, kind: input, shape index: {}]
  %s2 = inlined_call_operand.vmem [shape: bf16[16,640], index: 2, kind: input, shape index: {}]
  %s3 = inlined_call_operand.vmem [shape: f32[1,640], index: 3, kind: input, shape index: {}]
  %s4 = inlined_call_operand.vmem [shape: bf16[128,8], index: 4, kind: input, shape index: {}]
  %s5 = inlined_call_operand.vmem [shape: f32[1,8], index: 5, kind: input, shape index: {}]
  %s6 = inlined_call_operand.vmem [shape: f32[8,32,8], index: 6, kind: output, shape index: {}]
  %s7 = sld [smem:[#allocation0]]
  $region57: #{tpu_custom_call.1} parent=0
    _
  %s9 = ssub.s32 1, %s7
  %s10 = scalar_select 0, %s9, %s7
  loop: start=0, step=1, limit=10
  $region2: #{tpu_custom_call.1} parent=0 // loop_pre_header
    _
  $region3: #{tpu_custom_call.1} parent=0 // loop_header
    %s12 = sphi 0, %s16
    %p13 = scmp.ge.s32.totalorder %s12, 10
    %s22 = sphi 0, %s24
    %s25 = sphi 0, %s22
    %s26 = sphi 0, %s25
    %s42 = sphi 0, %s26
    %s48 = sphi 0, %s50
    %s51 = sphi 0, %s48
    %s52 = sphi 0, %s51
    %s68 = sphi 0, %s52
    %s72 = sphi 0, %s72
    %s74 = sphi 0, %s72
    %s75 = sphi 0, %s74
    %s89 = sphi 0, %s75
    %s93 = sphi 0, %s93
    %s95 = sphi 0, %s93
    %s96 = sphi 0, %s95
    %s110 = sphi 0, %s96
    %s114 = sphi 0, %s114
    %s116 = sphi 0, %s114
    %s117 = sphi 0, %s116
    %s131 = sphi 0, %s117
    %s135 = sphi 0, %s135
    %s137 = sphi 0, %s135
    %s138 = sphi 0, %s137
    %s152 = sphi 0, %s138
    %s158 = sphi 0, %s160
    %s161 = sphi 0, %s158
    %s162 = sphi 0, %s161
    %s178 = sphi 0, %s162
  $region4: #{tpu_custom_call.1} parent=0 // loop_header_branch
    %15 = sbr.rel (%p13) target = $region8
  $region5: #{tpu_custom_call.1} parent=0 // loop_body
    %s17 = ssub.s32 %s12, 1
    %s18 = ssub.s32 %s12, 2
    %s19 = sadd.s32 %s12, 1
    %s20 = ssub.s32 %s12, %s19
    %p21 = scmp.eq.s32.totalorder %s20, 0
    %s23 = sadd.s32 %s22, 1
    %s24 = scalar_select %p21, %s22, %s23
    %p27 = pneg %p21
    %p28 = scmp.eq.s32.totalorder %s12, 7
    %p29 = por %p27, %p28
    %p30 = scmp.ne.s32.totalorder %s22, %s25
    %p31 = scmp.eq.s32.totalorder %s12, 0
    %p32 = por %p30, %p31
    %p33 = scmp.ne.s32.totalorder %s22, %s25
    %p34 = scmp.eq.s32.totalorder %s17, 7
    %p35 = por %p33, %p34
    %p36 = scmp.ne.s32.totalorder %s25, %s26
    %p37 = scmp.eq.s32.totalorder %s17, 0
    %p38 = por %p36, %p37
    %p39 = scmp.ne.s32.totalorder %s25, %s26
    %p40 = scmp.eq.s32.totalorder %s18, 7
    %p41 = por %p39, %p40
    %p43 = scmp.ne.s32.totalorder %s26, %s42
    %p44 = scmp.eq.s32.totalorder %s18, 0
    %p45 = por %p43, %p44
    %s46 = ssub.s32 %s12, %s19
    %p47 = scmp.eq.s32.totalorder %s46, 0
    %s49 = sadd.s32 %s48, 1
    %s50 = scalar_select %p47, %s48, %s49
    %p53 = pneg %p47
    %p54 = scmp.eq.s32.totalorder %s12, 7
    %p55 = por %p53, %p54
    %p56 = scmp.ne.s32.totalorder %s48, %s51
    %p57 = scmp.eq.s32.totalorder %s12, 0
    %p58 = por %p56, %p57
    %p59 = scmp.ne.s32.totalorder %s48, %s51
    %p60 = scmp.eq.s32.totalorder %s17, 7
    %p61 = por %p59, %p60
    %p62 = scmp.ne.s32.totalorder %s51, %s52
    %p63 = scmp.eq.s32.totalorder %s17, 0
    %p64 = por %p62, %p63
    %p65 = scmp.ne.s32.totalorder %s51, %s52
    %p66 = scmp.eq.s32.totalorder %s18, 7
    %p67 = por %p65, %p66
    %p69 = scmp.ne.s32.totalorder %s52, %s68
    %p70 = scmp.eq.s32.totalorder %s18, 0
    %p71 = por %p69, %p70
    %s73 = sadd.s32 %s72, 1
    %p76 = scmp.eq.s32.totalorder %s12, 7
    %p77 = scmp.ne.s32.totalorder %s72, %s74
    %p78 = scmp.eq.s32.totalorder %s12, 0
    %p79 = por %p77, %p78
    %p80 = scmp.ne.s32.totalorder %s72, %s74
    %p81 = scmp.eq.s32.totalorder %s17, 7
    %p82 = por %p80, %p81
    %p83 = scmp.ne.s32.totalorder %s74, %s75
    %p84 = scmp.eq.s32.totalorder %s17, 0
    %p85 = por %p83, %p84
    %p86 = scmp.ne.s32.totalorder %s74, %s75
    %p87 = scmp.eq.s32.totalorder %s18, 7
    %p88 = por %p86, %p87
    %p90 = scmp.ne.s32.totalorder %s75, %s89
    %p91 = scmp.eq.s32.totalorder %s18, 0
    %p92 = por %p90, %p91
    %s94 = sadd.s32 %s93, 1
    %p97 = scmp.eq.s32.totalorder %s12, 7
    %p98 = scmp.ne.s32.totalorder %s93, %s95
    %p99 = scmp.eq.s32.totalorder %s12, 0
    %p100 = por %p98, %p99
    %p101 = scmp.ne.s32.totalorder %s93, %s95
    %p102 = scmp.eq.s32.totalorder %s17, 7
    %p103 = por %p101, %p102
    %p104 = scmp.ne.s32.totalorder %s95, %s96
    %p105 = scmp.eq.s32.totalorder %s17, 0
    %p106 = por %p104, %p105
    %p107 = scmp.ne.s32.totalorder %s95, %s96
    %p108 = scmp.eq.s32.totalorder %s18, 7
    %p109 = por %p107, %p108
    %p111 = scmp.ne.s32.totalorder %s96, %s110
    %p112 = scmp.eq.s32.totalorder %s18, 0
    %p113 = por %p111, %p112
    %s115 = sadd.s32 %s114, 1
    %p118 = scmp.eq.s32.totalorder %s12, 7
    %p119 = scmp.ne.s32.totalorder %s114, %s116
    %p120 = scmp.eq.s32.totalorder %s12, 0
    %p121 = por %p119, %p120
    %p122 = scmp.ne.s32.totalorder %s114, %s116
    %p123 = scmp.eq.s32.totalorder %s17, 7
    %p124 = por %p122, %p123
    %p125 = scmp.ne.s32.totalorder %s116, %s117
    %p126 = scmp.eq.s32.totalorder %s17, 0
    %p127 = por %p125, %p126
    %p128 = scmp.ne.s32.totalorder %s116, %s117
    %p129 = scmp.eq.s32.totalorder %s18, 7
    %p130 = por %p128, %p129
    %p132 = scmp.ne.s32.totalorder %s117, %s131
    %p133 = scmp.eq.s32.totalorder %s18, 0
    %p134 = por %p132, %p133
    %s136 = sadd.s32 %s135, 1
    %p139 = scmp.eq.s32.totalorder %s12, 7
    %p140 = scmp.ne.s32.totalorder %s135, %s137
    %p141 = scmp.eq.s32.totalorder %s12, 0
    %p142 = por %p140, %p141
    %p143 = scmp.ne.s32.totalorder %s135, %s137
    %p144 = scmp.eq.s32.totalorder %s17, 7
    %p145 = por %p143, %p144
    %p146 = scmp.ne.s32.totalorder %s137, %s138
    %p147 = scmp.eq.s32.totalorder %s17, 0
    %p148 = por %p146, %p147
    %p149 = scmp.ne.s32.totalorder %s137, %s138
    %p150 = scmp.eq.s32.totalorder %s18, 7
    %p151 = por %p149, %p150
    %p153 = scmp.ne.s32.totalorder %s138, %s152
    %p154 = scmp.eq.s32.totalorder %s18, 0
    %p155 = por %p153, %p154
    %s156 = ssub.s32 %s12, %s19
    %p157 = scmp.eq.s32.totalorder %s156, 0
    %s159 = sadd.s32 %s158, 1
    %s160 = scalar_select %p157, %s158, %s159
    %p163 = pneg %p157
    %p164 = scmp.eq.s32.totalorder %s12, 7
    %p165 = por %p163, %p164
    %p166 = scmp.ne.s32.totalorder %s158, %s161
    %p167 = scmp.eq.s32.totalorder %s12, 0
    %p168 = por %p166, %p167
    %p169 = scmp.ne.s32.totalorder %s158, %s161
    %p170 = scmp.eq.s32.totalorder %s17, 7
    %p171 = por %p169, %p170
    %p172 = scmp.ne.s32.totalorder %s161, %s162
    %p173 = scmp.eq.s32.totalorder %s17, 0
    %p174 = por %p172, %p173
    %p175 = scmp.ne.s32.totalorder %s161, %s162
    %p176 = scmp.eq.s32.totalorder %s18, 7
    %p177 = por %p175, %p176
    %p179 = scmp.ne.s32.totalorder %s162, %s178
    %p180 = scmp.eq.s32.totalorder %s18, 0
    %p181 = por %p179, %p180
    %p182 = scmp.le.s32.totalorder 1, %s12
    %p183 = scmp.lt.s32.totalorder %s12, 9
    %p184 = pnand %p182, %p183
    %p185 = pneg %p184
    // Predicated region
    $region9: #{tpu_custom_call.1} parent=5 // pred_check
      _
    $region10: #{tpu_custom_call.1} parent=5 // pred_check_branch
      %187 = sbr.rel (%p184) target = $region12
    $region11: #{tpu_custom_call.1} parent=5 // pred_region
      %s188 = ssub.s32 %s12, 1
      // Predicated region
      $region13: #{tpu_custom_call.1} parent=11 // pred_check
        %p189 = pneg %p85
      $region14: #{tpu_custom_call.1} parent=11 // pred_check_branch
        %191 = sbr.rel (%p189) target = $region16
      $region15: #{tpu_custom_call.1} parent=11 // pred_region
        _
      $region16: #{tpu_custom_call.1} parent=11 // pred_fallthru
        _
      // Predicated region
      $region17: #{tpu_custom_call.1} parent=11 // pred_check
        %p192 = pneg %p106
      $region18: #{tpu_custom_call.1} parent=11 // pred_check_branch
        %194 = sbr.rel (%p192) target = $region20
      $region19: #{tpu_custom_call.1} parent=11 // pred_region
        _
      $region20: #{tpu_custom_call.1} parent=11 // pred_fallthru
        _
      // Predicated region
      $region21: #{tpu_custom_call.1} parent=11 // pred_check
        %p195 = pneg %p127
      $region22: #{tpu_custom_call.1} parent=11 // pred_check_branch
        %197 = sbr.rel (%p195) target = $region24
      $region23: #{tpu_custom_call.1} parent=11 // pred_region
        _
      $region24: #{tpu_custom_call.1} parent=11 // pred_fallthru
        _
      // Predicated region
      $region25: #{tpu_custom_call.1} parent=11 // pred_check
        %p198 = pneg %p148
      $region26: #{tpu_custom_call.1} parent=11 // pred_check_branch
        %200 = sbr.rel (%p198) target = $region28
      $region27: #{tpu_custom_call.1} parent=11 // pred_region
        _
      $region28: #{tpu_custom_call.1} parent=11 // pred_fallthru
        _
    $region12: #{tpu_custom_call.1} parent=5 // pred_fallthru
      _
    %p201 = scmp.lt.s32.totalorder %s12, 8
    // Predicated region
    $region29: #{tpu_custom_call.1} parent=5 // pred_check
      %p202 = pneg %p201
    $region30: #{tpu_custom_call.1} parent=5 // pred_check_branch
      %204 = sbr.rel (%p202) target = $region32
    $region31: #{tpu_custom_call.1} parent=5 // pred_region
      // Predicated region
      $region33: #{tpu_custom_call.1} parent=31 // pred_check
        %p205 = pneg %p32
      $region34: #{tpu_custom_call.1} parent=31 // pred_check_branch
        %207 = sbr.rel (%p205) target = $region36
      $region35: #{tpu_custom_call.1} parent=31 // pred_region
        %p208 = scmp.lt.s32.totalorder %s12, 7
        %s209 = scalar_select %p208, %s12, 7
        %s210 = smul.addr %s209, 4
        %s211 = smul.addr %s210, 4
        %s212 = scalar_lea.vmem %s0, %s211
      $region36: #{tpu_custom_call.1} parent=31 // pred_fallthru
        _
      // Predicated region
      $region37: #{tpu_custom_call.1} parent=31 // pred_check
        %p213 = pneg %p58
      $region38: #{tpu_custom_call.1} parent=31 // pred_check_branch
        %215 = sbr.rel (%p213) target = $region40
      $region39: #{tpu_custom_call.1} parent=31 // pred_region
        %p216 = scmp.lt.s32.totalorder %s12, 7
        %s217 = scalar_select %p216, %s12, 7
        %s218 = smul.addr %s217, 20
        %s219 = smul.addr %s218, 4
        %s220 = scalar_lea.vmem %s1, %s219
      $region40: #{tpu_custom_call.1} parent=31 // pred_fallthru
        _
    $region32: #{tpu_custom_call.1} parent=5 // pred_fallthru
      _
    %p221 = scmp.le.s32.totalorder 1, %s12
    %p222 = scmp.lt.s32.totalorder %s12, 9
    %p223 = pnand %p221, %p222
    %p224 = pneg %p223
    // Predicated region
    $region41: #{tpu_custom_call.1} parent=5 // pred_check
      _
    $region42: #{tpu_custom_call.1} parent=5 // pred_check_branch
      %226 = sbr.rel (%p223) target = $region44
    $region43: #{tpu_custom_call.1} parent=5 // pred_region
      %s227 = ssub.s32 %s12, 1
      %p228 = scmp.lt.s32.totalorder %s17, 7
      %s229 = scalar_select %p228, %s17, 7
      %s230 = smul.addr %s229, 4
      %s231 = smul.addr %s230, 4
      %s232 = scalar_lea.vmem %s0, %s231
      %p233 = pneg %p38
      %p234 = pneg %p35
      %p235 = scmp.lt.s32.totalorder %s17, 7
      %s236 = scalar_select %p235, %s17, 7
      %s237 = smul.addr %s236, 20
      %s238 = smul.addr %s237, 4
      %s239 = scalar_lea.vmem %s1, %s238
      %p240 = pneg %p64
      %p241 = pneg %p61
      %p242 = pneg %p85
      %p243 = pneg %p82
      %p244 = pneg %p106
      %p245 = pneg %p103
      %p246 = pneg %p127
      %p247 = pneg %p124
      %p248 = pneg %p148
      %p249 = pneg %p145
      %p250 = pneg %p174
      %p251 = pneg %p171
      %p252 = scmp.lt.s32.totalorder %s17, 7
      %s253 = scalar_select %p252, %s17, 7
      %s254 = smul.addr %s253, 4
      %s255 = smul.addr %s254, 8
      %s256 = scalar_lea.vmem %s6, %s255
      %p257 = scmp.lt.s32.totalorder %s17, 7
      %s258 = scalar_select %p257, %s17, 7
      %s259 = smul.addr %s258, 4
      %s260 = smul.addr %s259, 4
      %s261 = scalar_lea.vmem %s0, %s260
      %p262 = scmp.lt.s32.totalorder %s17, 7
      %s263 = scalar_select %p262, %s17, 7
      %s264 = smul.addr %s263, 20
      %s265 = smul.addr %s264, 4
      %s266 = scalar_lea.vmem %s1, %s265
      %p267 = scmp.lt.s32.totalorder %s17, 7
      %s268 = scalar_select %p267, %s17, 7
      %s269 = smul.addr %s268, 4
      %s270 = smul.addr %s269, 8
      %s271 = scalar_lea.vmem %s6, %s270
      %v273 = vld [vmem:[%s261] sm:$0xf]
      %v274 = vld [vmem:[%s261 + $0x4] sm:$0xf]
      %v275 = vld [vmem:[%s261 + $0x8] sm:$0xf]
      %v276 = vld [vmem:[%s261 + $0xc] sm:$0xf]
      %v277 = vld [vmem:[%s2] sm:$0xff]
      %v278 = vld [vmem:[%s2 + $0x8] sm:$0xff]
      %v279 = vld [vmem:[%s2 + $0x10] sm:$0xf]
      %v280 = vld [vmem:[%s2 + $0x14] sm:$0xff]
      %v281 = vld [vmem:[%s2 + $0x1c] sm:$0xff]
      %v282 = vld [vmem:[%s2 + $0x24] sm:$0xf]
      %v287 = vunpack.c.l.b16 %v273
      %v288 = vunpack.c.l.b16 %v274
      %v289 = vunpack.c.l.b16 %v275
      %v290 = vunpack.c.l.b16 %v276
      %v291 = vpack.c.b16 %v288, %v287
      %v292 = vpack.c.b16 %v290, %v289
      %v299 = vunpack.c.l.b16 %v277
      %v300 = vunpack.c.h.b16 %v277
      %v301 = vunpack.c.l.b16 %v278
      %v302 = vunpack.c.h.b16 %v278
      %v303 = vunpack.c.l.b16 %v279
      %v304 = vunpack.c.l.b16 %v280
      %v305 = vunpack.c.h.b16 %v280
      %v306 = vunpack.c.l.b16 %v281
      %v307 = vunpack.c.h.b16 %v281
      %v308 = vunpack.c.l.b16 %v282
      %v309 = vpack.c.b16 %v304, %v299
      %v310 = vpack.c.b16 %v305, %v300
      %v311 = vpack.c.b16 %v306, %v301
      %v312 = vpack.c.b16 %v307, %v302
      %v313 = vpack.c.b16 %v308, %v303
      %vm319 = vcmask 130048
      %v321 = vsel %vm319, %v291, 0
      %v324 = vsel %vm319, %v292, 0
      %326 = vmatpush.bf16.msra.mxu0 0
      %327 = vmatpush.bf16.msra.mxu0 0
      %328 = vmatpush.bf16.msra.mxu0 0
      %329 = vmatpush.bf16.msra.mxu0 0
      %330 = vmatpush.bf16.msra.mxu0 0
      %331 = vmatpush.bf16.msra.mxu0 0
      %332 = vmatpush.bf16.msra.mxu0 0
      %333 = vmatpush.bf16.msra.mxu0 %v309
      %334 = vmatmul.bf16.gmra.mxu0 %v321
      %v335 = vpop.f32.mrf.mxu0
      %v336 = vadd.f32 0.0, %v335
      %v337 = vpop.f32.mrf.mxu0
      %v338 = vadd.f32 0.0, %v337
      %339 = vmatmul.bf16.gmra.mxu0 %v324
      %v340 = vpop.f32.mrf.mxu0
      %v341 = vadd.f32 0.0, %v340
      %v342 = vpop.f32.mrf.mxu0
      %v343 = vadd.f32 0.0, %v342
      %344 = vdwg.mxu0
      %345 = vmatpush.bf16.msra.mxu0 0
      %346 = vmatpush.bf16.msra.mxu0 0
      %347 = vmatpush.bf16.msra.mxu0 0
      %348 = vmatpush.bf16.msra.mxu0 0
      %349 = vmatpush.bf16.msra.mxu0 0
      %350 = vmatpush.bf16.msra.mxu0 0
      %351 = vmatpush.bf16.msra.mxu0 0
      %352 = vmatpush.bf16.msra.mxu0 %v310
      %353 = vmatmul.bf16.gmra.mxu0 %v321
      %v354 = vpop.f32.mrf.mxu0
      %v355 = vadd.f32 0.0, %v354
      %v356 = vpop.f32.mrf.mxu0
      %v357 = vadd.f32 0.0, %v356
      %358 = vmatmul.bf16.gmra.mxu0 %v324
      %v359 = vpop.f32.mrf.mxu0
      %v360 = vadd.f32 0.0, %v359
      %v361 = vpop.f32.mrf.mxu0
      %v362 = vadd.f32 0.0, %v361
      %363 = vdwg.mxu0
      %364 = vmatpush.bf16.msra.mxu0 0
      %365 = vmatpush.bf16.msra.mxu0 0
      %366 = vmatpush.bf16.msra.mxu0 0
      %367 = vmatpush.bf16.msra.mxu0 0
      %368 = vmatpush.bf16.msra.mxu0 0
      %369 = vmatpush.bf16.msra.mxu0 0
      %370 = vmatpush.bf16.msra.mxu0 0
      %371 = vmatpush.bf16.msra.mxu0 %v311
      %372 = vmatmul.bf16.gmra.mxu0 %v321
      %v373 = vpop.f32.mrf.mxu0
      %v374 = vadd.f32 0.0, %v373
      %v375 = vpop.f32.mrf.mxu0
      %v376 = vadd.f32 0.0, %v375
      %377 = vmatmul.bf16.gmra.mxu0 %v324
      %v378 = vpop.f32.mrf.mxu0
      %v379 = vadd.f32 0.0, %v378
      %v380 = vpop.f32.mrf.mxu0
      %v381 = vadd.f32 0.0, %v380
      %382 = vdwg.mxu0
      %383 = vmatpush.bf16.msra.mxu0 0
      %384 = vmatpush.bf16.msra.mxu0 0
      %385 = vmatpush.bf16.msra.mxu0 0
      %386 = vmatpush.bf16.msra.mxu0 0
      %387 = vmatpush.bf16.msra.mxu0 0
      %388 = vmatpush.bf16.msra.mxu0 0
      %389 = vmatpush.bf16.msra.mxu0 0
      %390 = vmatpush.bf16.msra.mxu0 %v312
      %391 = vmatmul.bf16.gmra.mxu0 %v321
      %v392 = vpop.f32.mrf.mxu0
      %v393 = vadd.f32 0.0, %v392
      %v394 = vpop.f32.mrf.mxu0
      %v395 = vadd.f32 0.0, %v394
      %396 = vmatmul.bf16.gmra.mxu0 %v324
      %v397 = vpop.f32.mrf.mxu0
      %v398 = vadd.f32 0.0, %v397
      %v399 = vpop.f32.mrf.mxu0
      %v400 = vadd.f32 0.0, %v399
      %401 = vdwg.mxu0
      %402 = vmatpush.bf16.msra.mxu0 0
      %403 = vmatpush.bf16.msra.mxu0 0
      %404 = vmatpush.bf16.msra.mxu0 0
      %405 = vmatpush.bf16.msra.mxu0 0
      %406 = vmatpush.bf16.msra.mxu0 0
      %407 = vmatpush.bf16.msra.mxu0 0
      %408 = vmatpush.bf16.msra.mxu0 0
      %409 = vmatpush.bf16.msra.mxu0 %v313
      %410 = vmatmul.bf16.gmra.mxu0 %v321
      %v411 = vpop.f32.mrf.mxu0
      %v412 = vadd.f32 0.0, %v411
      %v413 = vpop.f32.mrf.mxu0
      %v414 = vadd.f32 0.0, %v413
      %415 = vmatmul.bf16.gmra.mxu0 %v324
      %v416 = vpop.f32.mrf.mxu0
      %v417 = vadd.f32 0.0, %v416
      %v418 = vpop.f32.mrf.mxu0
      %v419 = vadd.f32 0.0, %v418
      %420 = vdwg.mxu0
      %v421 = vpack.c.bf16 %v355, %v336
      %v422 = vpack.c.bf16 %v393, %v374
      %v423 = vpack.c.bf16 %v412, %v412
      %v424 = vpack.c.bf16 %v357, %v338
      %v425 = vpack.c.bf16 %v395, %v376
      %v426 = vpack.c.bf16 %v414, %v414
      %v427 = vpack.c.bf16 %v360, %v341
      %v428 = vpack.c.bf16 %v398, %v379
      %v429 = vpack.c.bf16 %v417, %v417
      %v430 = vpack.c.bf16 %v362, %v343
      %v431 = vpack.c.bf16 %v400, %v381
      %v432 = vpack.c.bf16 %v419, %v419
      %v433 = vld [vmem:[%s266] sm:$0xf]
      %v434 = vld [vmem:[%s266 + $0x4] sm:$0xf]
      %v435 = vld [vmem:[%s266 + $0x8] sm:$0xf]
      %v436 = vld [vmem:[%s266 + $0xc] sm:$0xf]
      %v437 = vld [vmem:[%s3] sm:$0x1]
      %v439 = vperm.slane %v437, 0
      %v445 = vunpack.c.l.b16 %v433
      %v446 = vunpack.c.l.b16 %v434
      %v447 = vunpack.c.l.b16 %v435
      %v448 = vunpack.c.l.b16 %v436
      %v449 = vpack.c.b16 %v446, %v445
      %v450 = vpack.c.b16 %v448, %v447
      %v455 = vunpack.c.l.b16 %v421
      %v456 = vunpack.c.l.b16 %v424
      %v457 = vunpack.c.l.b16 %v427
      %v458 = vunpack.c.l.b16 %v430
      %v459 = vpack.c.b16 %v456, %v455
      %v460 = vpack.c.b16 %v458, %v457
      %vm463 = vcmask 261120
      %v465 = vsel %vm463, %v449, 0
      %v468 = vsel %vm463, %v450, 0
      %470 = vmatpush.bf16.msra.mxu0 0
      %471 = vmatpush.bf16.msra.mxu0 0
      %472 = vmatpush.bf16.msra.mxu0 0
      %473 = vmatpush.bf16.msra.mxu0 0
      %474 = vmatpush.bf16.msra.mxu0 0
      %475 = vmatpush.bf16.msra.mxu0 0
      %476 = vmatpush.bf16.msra.mxu0 %v460
      %477 = vmatpush.bf16.msra.mxu0 %v459
      %478 = vmatmul.bf16.gmra.mxu0 %v465
      %v479 = vpop.f32.mrf.mxu0
      %v480 = vadd.f32 %v439, %v479
      %v481 = vpop.f32.mrf.mxu0
      %v482 = vadd.f32 %v439, %v481
      %483 = vmatmul.bf16.gmra.mxu0 %v468
      %v484 = vpop.f32.mrf.mxu0
      %v485 = vadd.f32 %v439, %v484
      %v486 = vpop.f32.mrf.mxu0
      %v487 = vadd.f32 %v439, %v486
      %488 = vdwg.mxu0
      %v489 = vmax.f32 %v480, 0.0
      %v490 = vmax.f32 %v482, 0.0
      %v491 = vmax.f32 %v485, 0.0
      %v492 = vmax.f32 %v487, 0.0
      %v493 = vadd.f32 %v489, 0.0
      %v494 = vadd.f32 %v490, 0.0
      %v495 = vadd.f32 %v491, 0.0
      %v496 = vadd.f32 %v492, 0.0
      %v497 = vld [vmem:[%s266 + $0x10] sm:$0xf]
      %v498 = vld [vmem:[%s266 + $0x14] sm:$0xf]
      %v499 = vld [vmem:[%s266 + $0x18] sm:$0xf]
      %v500 = vld [vmem:[%s266 + $0x1c] sm:$0xf]
      %v501 = vld [vmem:[%s3 + $0x1] sm:$0x1]
      %v503 = vperm.slane %v501, 0
      %v509 = vunpack.c.l.b16 %v497
      %v510 = vunpack.c.l.b16 %v498
      %v511 = vunpack.c.l.b16 %v499
      %v512 = vunpack.c.l.b16 %v500
      %v513 = vpack.c.b16 %v510, %v509
      %v514 = vpack.c.b16 %v512, %v511
      %v515 = vunpack.c.h.b16 %v421
      %v516 = vunpack.c.h.b16 %v424
      %v517 = vunpack.c.h.b16 %v427
      %v518 = vunpack.c.h.b16 %v430
      %v519 = vpack.c.b16 %v516, %v515
      %v520 = vpack.c.b16 %v518, %v517
      %v524 = vsel %vm463, %v513, 0
      %v527 = vsel %vm463, %v514, 0
      %529 = vmatpush.bf16.msra.mxu0 0
      %530 = vmatpush.bf16.msra.mxu0 0
      %531 = vmatpush.bf16.msra.mxu0 0
      %532 = vmatpush.bf16.msra.mxu0 0
      %533 = vmatpush.bf16.msra.mxu0 0
      %534 = vmatpush.bf16.msra.mxu0 0
      %535 = vmatpush.bf16.msra.mxu0 %v520
      %536 = vmatpush.bf16.msra.mxu0 %v519
      %537 = vmatmul.bf16.gmra.mxu0 %v524
      %v538 = vpop.f32.mrf.mxu0
      %v539 = vadd.f32 %v503, %v538
      %v540 = vpop.f32.mrf.mxu0
      %v541 = vadd.f32 %v503, %v540
      %542 = vmatmul.bf16.gmra.mxu0 %v527
      %v543 = vpop.f32.mrf.mxu0
      %v544 = vadd.f32 %v503, %v543
      %v545 = vpop.f32.mrf.mxu0
      %v546 = vadd.f32 %v503, %v545
      %547 = vdwg.mxu0
      %v548 = vmax.f32 %v539, 0.0
      %v549 = vmax.f32 %v541, 0.0
      %v550 = vmax.f32 %v544, 0.0
      %v551 = vmax.f32 %v546, 0.0
      %v552 = vadd.f32 %v493, %v548
      %v553 = vadd.f32 %v494, %v549
      %v554 = vadd.f32 %v495, %v550
      %v555 = vadd.f32 %v496, %v551
      %v556 = vld [vmem:[%s266 + $0x20] sm:$0xf]
      %v557 = vld [vmem:[%s266 + $0x24] sm:$0xf]
      %v558 = vld [vmem:[%s266 + $0x28] sm:$0xf]
      %v559 = vld [vmem:[%s266 + $0x2c] sm:$0xf]
      %v560 = vld [vmem:[%s3 + $0x2] sm:$0x1]
      %v562 = vperm.slane %v560, 0
      %v568 = vunpack.c.l.b16 %v556
      %v569 = vunpack.c.l.b16 %v557
      %v570 = vunpack.c.l.b16 %v558
      %v571 = vunpack.c.l.b16 %v559
      %v572 = vpack.c.b16 %v569, %v568
      %v573 = vpack.c.b16 %v571, %v570
      %v578 = vunpack.c.l.b16 %v422
      %v579 = vunpack.c.l.b16 %v425
      %v580 = vunpack.c.l.b16 %v428
      %v581 = vunpack.c.l.b16 %v431
      %v582 = vpack.c.b16 %v579, %v578
      %v583 = vpack.c.b16 %v581, %v580
      %v587 = vsel %vm463, %v572, 0
      %v590 = vsel %vm463, %v573, 0
      %592 = vmatpush.bf16.msra.mxu0 0
      %593 = vmatpush.bf16.msra.mxu0 0
      %594 = vmatpush.bf16.msra.mxu0 0
      %595 = vmatpush.bf16.msra.mxu0 0
      %596 = vmatpush.bf16.msra.mxu0 0
      %597 = vmatpush.bf16.msra.mxu0 0
      %598 = vmatpush.bf16.msra.mxu0 %v583
      %599 = vmatpush.bf16.msra.mxu0 %v582
      %600 = vmatmul.bf16.gmra.mxu0 %v587
      %v601 = vpop.f32.mrf.mxu0
      %v602 = vadd.f32 %v562, %v601
      %v603 = vpop.f32.mrf.mxu0
      %v604 = vadd.f32 %v562, %v603
      %605 = vmatmul.bf16.gmra.mxu0 %v590
      %v606 = vpop.f32.mrf.mxu0
      %v607 = vadd.f32 %v562, %v606
      %v608 = vpop.f32.mrf.mxu0
      %v609 = vadd.f32 %v562, %v608
      %610 = vdwg.mxu0
      %v611 = vmax.f32 %v602, 0.0
      %v612 = vmax.f32 %v604, 0.0
      %v613 = vmax.f32 %v607, 0.0
      %v614 = vmax.f32 %v609, 0.0
      %v615 = vadd.f32 %v552, %v611
      %v616 = vadd.f32 %v553, %v612
      %v617 = vadd.f32 %v554, %v613
      %v618 = vadd.f32 %v555, %v614
      %v619 = vld [vmem:[%s266 + $0x30] sm:$0xf]
      %v620 = vld [vmem:[%s266 + $0x34] sm:$0xf]
      %v621 = vld [vmem:[%s266 + $0x38] sm:$0xf]
      %v622 = vld [vmem:[%s266 + $0x3c] sm:$0xf]
      %v623 = vld [vmem:[%s3 + $0x3] sm:$0x1]
      %v625 = vperm.slane %v623, 0
      %v631 = vunpack.c.l.b16 %v619
      %v632 = vunpack.c.l.b16 %v620
      %v633 = vunpack.c.l.b16 %v621
      %v634 = vunpack.c.l.b16 %v622
      %v635 = vpack.c.b16 %v632, %v631
      %v636 = vpack.c.b16 %v634, %v633
      %v637 = vunpack.c.h.b16 %v422
      %v638 = vunpack.c.h.b16 %v425
      %v639 = vunpack.c.h.b16 %v428
      %v640 = vunpack.c.h.b16 %v431
      %v641 = vpack.c.b16 %v638, %v637
      %v642 = vpack.c.b16 %v640, %v639
      %v646 = vsel %vm463, %v635, 0
      %v649 = vsel %vm463, %v636, 0
      %651 = vmatpush.bf16.msra.mxu0 0
      %652 = vmatpush.bf16.msra.mxu0 0
      %653 = vmatpush.bf16.msra.mxu0 0
      %654 = vmatpush.bf16.msra.mxu0 0
      %655 = vmatpush.bf16.msra.mxu0 0
      %656 = vmatpush.bf16.msra.mxu0 0
      %657 = vmatpush.bf16.msra.mxu0 %v642
      %658 = vmatpush.bf16.msra.mxu0 %v641
      %659 = vmatmul.bf16.gmra.mxu0 %v646
      %v660 = vpop.f32.mrf.mxu0
      %v661 = vadd.f32 %v625, %v660
      %v662 = vpop.f32.mrf.mxu0
      %v663 = vadd.f32 %v625, %v662
      %664 = vmatmul.bf16.gmra.mxu0 %v649
      %v665 = vpop.f32.mrf.mxu0
      %v666 = vadd.f32 %v625, %v665
      %v667 = vpop.f32.mrf.mxu0
      %v668 = vadd.f32 %v625, %v667
      %669 = vdwg.mxu0
      %v670 = vmax.f32 %v661, 0.0
      %v671 = vmax.f32 %v663, 0.0
      %v672 = vmax.f32 %v666, 0.0
      %v673 = vmax.f32 %v668, 0.0
      %v674 = vadd.f32 %v615, %v670
      %v675 = vadd.f32 %v616, %v671
      %v676 = vadd.f32 %v617, %v672
      %v677 = vadd.f32 %v618, %v673
      %v678 = vld [vmem:[%s266 + $0x40] sm:$0xf]
      %v679 = vld [vmem:[%s266 + $0x44] sm:$0xf]
      %v680 = vld [vmem:[%s266 + $0x48] sm:$0xf]
      %v681 = vld [vmem:[%s266 + $0x4c] sm:$0xf]
      %v682 = vld [vmem:[%s3 + $0x4] sm:$0x1]
      %v684 = vperm.slane %v682, 0
      %v690 = vunpack.c.l.b16 %v678
      %v691 = vunpack.c.l.b16 %v679
      %v692 = vunpack.c.l.b16 %v680
      %v693 = vunpack.c.l.b16 %v681
      %v694 = vpack.c.b16 %v691, %v690
      %v695 = vpack.c.b16 %v693, %v692
      %v700 = vunpack.c.l.b16 %v423
      %v701 = vunpack.c.l.b16 %v426
      %v702 = vunpack.c.l.b16 %v429
      %v703 = vunpack.c.l.b16 %v432
      %v704 = vpack.c.b16 %v701, %v700
      %v705 = vpack.c.b16 %v703, %v702
      %v709 = vsel %vm463, %v694, 0
      %v712 = vsel %vm463, %v695, 0
      %714 = vmatpush.bf16.msra.mxu0 0
      %715 = vmatpush.bf16.msra.mxu0 0
      %716 = vmatpush.bf16.msra.mxu0 0
      %717 = vmatpush.bf16.msra.mxu0 0
      %718 = vmatpush.bf16.msra.mxu0 0
      %719 = vmatpush.bf16.msra.mxu0 0
      %720 = vmatpush.bf16.msra.mxu0 %v705
      %721 = vmatpush.bf16.msra.mxu0 %v704
      %722 = vmatmul.bf16.gmra.mxu0 %v709
      %v723 = vpop.f32.mrf.mxu0
      %v724 = vadd.f32 %v684, %v723
      %v725 = vpop.f32.mrf.mxu0
      %v726 = vadd.f32 %v684, %v725
      %727 = vmatmul.bf16.gmra.mxu0 %v712
      %v728 = vpop.f32.mrf.mxu0
      %v729 = vadd.f32 %v684, %v728
      %v730 = vpop.f32.mrf.mxu0
      %v731 = vadd.f32 %v684, %v730
      %732 = vdwg.mxu0
      %v733 = vmax.f32 %v724, 0.0
      %v734 = vmax.f32 %v726, 0.0
      %v735 = vmax.f32 %v729, 0.0
      %v736 = vmax.f32 %v731, 0.0
      %v737 = vadd.f32 %v674, %v733
      %v738 = vadd.f32 %v675, %v734
      %v739 = vadd.f32 %v676, %v735
      %v740 = vadd.f32 %v677, %v736
      %v741 = vpack.c.bf16 %v738, %v737
      %v742 = vpack.c.bf16 %v740, %v739
      %v743 = vld [vmem:[%s4] sm:$0xf]
      %v744 = vld [vmem:[%s4 + $0x4] sm:$0xf]
      %v745 = vld [vmem:[%s4 + $0x8] sm:$0xf]
      %v746 = vld [vmem:[%s4 + $0xc] sm:$0xf]
      %v747 = vld [vmem:[%s4 + $0x10] sm:$0xf]
      %v748 = vld [vmem:[%s4 + $0x14] sm:$0xf]
      %v749 = vld [vmem:[%s4 + $0x18] sm:$0xf]
      %v750 = vld [vmem:[%s4 + $0x1c] sm:$0xf]
      %v751 = vld [vmem:[%s4 + $0x20] sm:$0xf]
      %v752 = vld [vmem:[%s4 + $0x24] sm:$0xf]
      %v753 = vld [vmem:[%s4 + $0x28] sm:$0xf]
      %v754 = vld [vmem:[%s4 + $0x2c] sm:$0xf]
      %v755 = vld [vmem:[%s4 + $0x30] sm:$0xf]
      %v756 = vld [vmem:[%s4 + $0x34] sm:$0xf]
      %v757 = vld [vmem:[%s4 + $0x38] sm:$0xf]
      %v758 = vld [vmem:[%s4 + $0x3c] sm:$0xf]
      %v759 = vld [vmem:[%s5] sm:$0x1]
      %v761 = vperm.slane %v759, 0
      %v779 = vunpack.c.l.b16 %v743
      %v780 = vunpack.c.l.b16 %v744
      %v781 = vunpack.c.l.b16 %v745
      %v782 = vunpack.c.l.b16 %v746
      %v783 = vunpack.c.l.b16 %v747
      %v784 = vunpack.c.l.b16 %v748
      %v785 = vunpack.c.l.b16 %v749
      %v786 = vunpack.c.l.b16 %v750
      %v787 = vunpack.c.l.b16 %v751
      %v788 = vunpack.c.l.b16 %v752
      %v789 = vunpack.c.l.b16 %v753
      %v790 = vunpack.c.l.b16 %v754
      %v791 = vunpack.c.l.b16 %v755
      %v792 = vunpack.c.l.b16 %v756
      %v793 = vunpack.c.l.b16 %v757
      %v794 = vunpack.c.l.b16 %v758
      %v795 = vpack.c.b16 %v780, %v779
      %v796 = vpack.c.b16 %v782, %v781
      %v797 = vpack.c.b16 %v784, %v783
      %v798 = vpack.c.b16 %v786, %v785
      %v799 = vpack.c.b16 %v788, %v787
      %v800 = vpack.c.b16 %v790, %v789
      %v801 = vpack.c.b16 %v792, %v791
      %v802 = vpack.c.b16 %v794, %v793
      %811 = vmatpush.bf16.msra.mxu0 %v802
      %812 = vmatpush.bf16.msra.mxu0 %v801
      %813 = vmatpush.bf16.msra.mxu0 %v800
      %814 = vmatpush.bf16.msra.mxu0 %v799
      %815 = vmatpush.bf16.msra.mxu0 %v798
      %816 = vmatpush.bf16.msra.mxu0 %v797
      %817 = vmatpush.bf16.msra.mxu0 %v796
      %818 = vmatpush.bf16.msra.mxu0 %v795
      %819 = vmatmul.bf16.gmra.mxu0 %v741
      %v820 = vpop.f32.mrf.mxu0
      %v821 = vadd.f32 %v761, %v820
      %v822 = vpop.f32.mrf.mxu0
      %v823 = vadd.f32 %v761, %v822
      %824 = vmatmul.bf16.gmra.mxu0 %v742
      %v825 = vpop.f32.mrf.mxu0
      %v826 = vadd.f32 %v761, %v825
      %v827 = vpop.f32.mrf.mxu0
      %v828 = vadd.f32 %v761, %v827
      %829 = vdwg.mxu0
      %vm830 = vcmask 64512
      %v831 = vsel %vm830, %v821, -inf
      %832 = vmax.xlane.f32.xlu0 %v831
      %v833 = vpop.xlane.xlu0 %832
      %v834 = vsel %vm830, %v823, -inf
      %835 = vmax.xlane.f32.xlu0 %v834
      %v836 = vpop.xlane.xlu0 %835
      %v837 = vsel %vm830, %v826, -inf
      %838 = vmax.xlane.f32.xlu0 %v837
      %v839 = vpop.xlane.xlu0 %838
      %v840 = vsel %vm830, %v828, -inf
      %841 = vmax.xlane.f32.xlu0 %v840
      %v842 = vpop.xlane.xlu0 %841
      %v843 = vsub.f32 %v821, %v833
      %v844 = vsub.f32 %v823, %v836
      %v845 = vsub.f32 %v826, %v839
      %v846 = vsub.f32 %v828, %v842
      %v847 = vmul.f32 %v843, 1.442695
      %v848 = vpow.pop %v847
      %v849 = vmul.f32 %v844, 1.442695
      %v850 = vpow.pop %v849
      %v851 = vmul.f32 %v845, 1.442695
      %v852 = vpow.pop %v851
      %v853 = vmul.f32 %v846, 1.442695
      %v854 = vpow.pop %v853
      %v855 = vsel %vm830, %v848, 0.0
      %856 = vadd.xlane.f32.xlu0 %v855
      %v857 = vpop.xlane.xlu0 %856
      %v858 = vsel %vm830, %v850, 0.0
      %859 = vadd.xlane.f32.xlu0 %v858
      %v860 = vpop.xlane.xlu0 %859
      %v861 = vsel %vm830, %v852, 0.0
      %862 = vadd.xlane.f32.xlu0 %v861
      %v863 = vpop.xlane.xlu0 %862
      %v864 = vsel %vm830, %v854, 0.0
      %865 = vadd.xlane.f32.xlu0 %v864
      %v866 = vpop.xlane.xlu0 %865
      %v867 = vlog2.pop %v857
      %v868 = vmul.f32 %v867, 0.6931472
      %v869 = vlog2.pop %v860
      %v870 = vmul.f32 %v869, 0.6931472
      %v871 = vlog2.pop %v863
      %v872 = vmul.f32 %v871, 0.6931472
      %v873 = vlog2.pop %v866
      %v874 = vmul.f32 %v873, 0.6931472
      %v875 = vsub.f32 %v843, %v868
      %v876 = vsub.f32 %v844, %v870
      %v877 = vsub.f32 %v845, %v872
      %v878 = vsub.f32 %v846, %v874
      %879 = vst.msk [vmem:[%s271] sm:$0xff] %vm830, %v875
      %880 = vst.msk [vmem:[%s271 + $0x8] sm:$0xff] %vm830, %v876
      %881 = vst.msk [vmem:[%s271 + $0x10] sm:$0xff] %vm830, %v877
      %882 = vst.msk [vmem:[%s271 + $0x18] sm:$0xff] %vm830, %v878
      %p883 = scmp.lt.s32.totalorder %s17, 7
      %s884 = scalar_select %p883, %s17, 7
      %s885 = smul.addr %s884, 4
      %s886 = smul.addr %s885, 8
      %s887 = scalar_lea.vmem %s6, %s886
      // Predicated region
      $region45: #{tpu_custom_call.1} parent=43 // pred_check
        %p888 = pneg %p171
      $region46: #{tpu_custom_call.1} parent=43 // pred_check_branch
        %890 = sbr.rel (%p888) target = $region48
      $region47: #{tpu_custom_call.1} parent=43 // pred_region
        _
      $region48: #{tpu_custom_call.1} parent=43 // pred_fallthru
        _
    $region44: #{tpu_custom_call.1} parent=5 // pred_fallthru
      _
    %p891 = scmp.le.s32.totalorder 2, %s12
    // Predicated region
    $region49: #{tpu_custom_call.1} parent=5 // pred_check
      %p892 = pneg %p891
    $region50: #{tpu_custom_call.1} parent=5 // pred_check_branch
      %894 = sbr.rel (%p892) target = $region52
    $region51: #{tpu_custom_call.1} parent=5 // pred_region
      %s895 = ssub.s32 %s12, 2
      // Predicated region
      $region53: #{tpu_custom_call.1} parent=51 // pred_check
        %p896 = pneg %p177
      $region54: #{tpu_custom_call.1} parent=51 // pred_check_branch
        %898 = sbr.rel (%p896) target = $region56
      $region55: #{tpu_custom_call.1} parent=51 // pred_region
        %p899 = scmp.lt.s32.totalorder %s18, 7
        %s900 = scalar_select %p899, %s18, 7
        %s901 = smul.addr %s900, 4
        %s902 = smul.addr %s901, 8
        %s903 = scalar_lea.vmem %s6, %s902
      $region56: #{tpu_custom_call.1} parent=51 // pred_fallthru
        _
    $region52: #{tpu_custom_call.1} parent=5 // pred_fallthru
      _
  $region6: #{tpu_custom_call.1} parent=0 // loop_footer
    %s16 = sadd.s32 1, %s12
  $region7: #{tpu_custom_call.1} parent=0 // loop_footer_branch
    %11 = sbr.rel target = $region3
  $region8: #{tpu_custom_call.1} parent=0 // loop_exit
    _

</llo_original>
